<compile_context>
chip_gen: v7x
topology: tpu7x:2x2x1
jax: 0.10.0
libtpu: 0.0.40
codegen_flags: <defaults>
</compile_context>

<pallas_src>
import functools

import jax
import jax.numpy as jnp
from jax.experimental import pallas as pl
from jax.experimental.pallas import tpu as pltpu


def _proj_head_kernel(x_ref, w1_ref, b1_ref, w2_ref, b2_ref, g_ref, beta_ref,
                      o_ref):
    # x tile: (bm, E).  Matmul operands keep their input dtype (bf16 stays
    # bf16 on the MXU); accumulation and the epilogue are f32.
    x = x_ref[...]

    # projected = x @ W1 + b1
    projected = jnp.dot(x, w1_ref[...], preferred_element_type=jnp.float32)
    projected = projected + b1_ref[...].astype(jnp.float32)

    # exact GELU (PyTorch nn.GELU() default, approximate='none')
    h = 0.5 * projected * (1.0 + jax.lax.erf(projected * 0.7071067811865476))

    # fc
    y = jnp.dot(h.astype(w2_ref.dtype), w2_ref[...],
                preferred_element_type=jnp.float32)
    y = y + b2_ref[...].astype(jnp.float32)

    # dropout == identity in eval; residual add with `projected`
    y = y + projected

    # LayerNorm over last dim (biased variance, eps=1e-5) — reuse centered d.
    mean = jnp.mean(y, axis=-1, keepdims=True)
    d = y - mean
    var = jnp.mean(d * d, axis=-1, keepdims=True)
    y_norm = d * jax.lax.rsqrt(var + 1e-5)

    o_ref[...] = (y_norm * g_ref[...].astype(jnp.float32)
                  + beta_ref[...].astype(jnp.float32)).astype(o_ref.dtype)


def _round_up(n, m):
    return ((n + m - 1) // m) * m


@functools.partial(jax.jit, static_argnames=("block_m",))
def projection_head_gelu(x, w1, b1, w2, b2, gamma, beta, *, block_m=256):
    """x: [B, E] -> [B, P].  Weights stored as [in, out] (transposed vs torch)."""
    B, E = x.shape
    P = w1.shape[1]
    assert block_m % 8 == 0, "block_m must be a multiple of the sublane (8)"

    # Effective M tile: as large as requested, but never (much) larger than the
    # padded batch.  On v7x pick block_m <= B/2 at the call site if you want
    # both TensorCores busy (grid length >= 2).
    bm = max(8, min(block_m, _round_up(B, 8)))
    B_pad = _round_up(B, bm)
    if B_pad != B:
        x = jnp.pad(x, ((0, B_pad - B), (0, 0)))

    # biases / LN params presented as (1, P) 2-D VMEM tiles
    b1_2d = b1.reshape(1, P)
    b2_2d = b2.reshape(1, P)
    g_2d = gamma.reshape(1, P)
    beta_2d = beta.reshape(1, P)

    grid = (B_pad // bm,)

    # VMEM budget: double-buffered x/out tiles, single-buffered weights/params,
    # plus fp32 intermediates (projected / h / y) of shape (bm, P).
    it = x.dtype.itemsize
    vmem_bytes = (
        2 * bm * E * it                       # x tile (double-buffered)
        + 2 * bm * P * it                     # out tile (double-buffered)
        + E * P * w1.dtype.itemsize           # W1 (single-buffered)
        + P * P * w2.dtype.itemsize           # W2 (single-buffered)
        + 4 * P * 4                           # b1, b2, gamma, beta
        + 4 * bm * P * 4                      # fp32 intermediates
    )
    vmem_limit = min(max(int(1.5 * vmem_bytes) + (2 << 20), 16 << 20), 100 << 20)

    single = pl.Buffered(1)   # grid-invariant operands: no double-buffering

    out = pl.pallas_call(
        _proj_head_kernel,
        out_shape=jax.ShapeDtypeStruct((B_pad, P), x.dtype),
        grid_spec=pltpu.PrefetchScalarGridSpec(
            num_scalar_prefetch=0,
            grid=grid,
            in_specs=[
                pl.BlockSpec((bm, E), lambda i: (i, 0)),                        # x tile
                pl.BlockSpec((E, P), lambda i: (0, 0), pipeline_mode=single),   # W1
                pl.BlockSpec((1, P), lambda i: (0, 0), pipeline_mode=single),   # b1
                pl.BlockSpec((P, P), lambda i: (0, 0), pipeline_mode=single),   # W2
                pl.BlockSpec((1, P), lambda i: (0, 0), pipeline_mode=single),   # b2
                pl.BlockSpec((1, P), lambda i: (0, 0), pipeline_mode=single),   # gamma
                pl.BlockSpec((1, P), lambda i: (0, 0), pipeline_mode=single),   # beta
            ],
            out_specs=pl.BlockSpec((bm, P), lambda i: (i, 0)),
        ),
        compiler_params=pltpu.CompilerParams(
            dimension_semantics=("parallel",),
            vmem_limit_bytes=vmem_limit,
        ),
    )(x, w1, b1_2d, w2, b2_2d, g_2d, beta_2d)

    if B_pad != B:
        out = out[:B]
    return out


def _reference(x, w1, b1, w2, b2, gamma, beta):
    projected = x @ w1 + b1
    h = jax.nn.gelu(projected, approximate=False)
    y = h @ w2 + b2
    y = y + projected
    mean = jnp.mean(y, axis=-1, keepdims=True)
    var = jnp.mean((y - mean) ** 2, axis=-1, keepdims=True)
    return (y - mean) / jnp.sqrt(var + 1e-5) * gamma + beta


if __name__ == "__main__":
    E = 32    # embedding_dim
    P = 128   # projection_dim (from the reference script)

    key = jax.random.PRNGKey(0)
    kx, k1, k2, k3, k4, kx2 = jax.random.split(key, 6)

    # deterministic synthetic parameters (Linear weights stored as [in, out])
    w1 = jax.random.normal(k1, (E, P), dtype=jnp.float32) * (1.0 / jnp.sqrt(E))
    b1 = jax.random.normal(k2, (P,), dtype=jnp.float32) * 0.01
    w2 = jax.random.normal(k3, (P, P), dtype=jnp.float32) * (1.0 / jnp.sqrt(P))
    b2 = jax.random.normal(k4, (P,), dtype=jnp.float32) * 0.01
    gamma = jnp.ones((P,), dtype=jnp.float32)
    beta = jnp.zeros((P,), dtype=jnp.float32)

    ok = True

    # 1) small batch (single tile, tile shrinks to fit the batch)
    x = jax.random.normal(kx, (8, E), dtype=jnp.float32)
    out = jax.block_until_ready(projection_head_gelu(x, w1, b1, w2, b2, gamma, beta))
    ref = _reference(x, w1, b1, w2, b2, gamma, beta)
    ok &= out.shape == (8, P)
    ok &= bool(jnp.allclose(out, ref, atol=1e-4, rtol=1e-4))

    # 2) non-multiple batch (exercises padding + multi-step grid with
    #    single-buffered weights)
    x2 = jax.random.normal(kx2, (300, E), dtype=jnp.float32)
    out2 = jax.block_until_ready(projection_head_gelu(x2, w1, b1, w2, b2, gamma, beta))
    ref2 = _reference(x2, w1, b1, w2, b2, gamma, beta)
    ok &= out2.shape == (300, P)
    ok &= bool(jnp.allclose(out2, ref2, atol=1e-4, rtol=1e-4))

    assert ok, "mismatch vs reference"
    print("KERNEL_OK")
</pallas_src>

<mosaic_0001>
module attributes {stable_mosaic.version = 11 : i64} {
  func.func @_proj_head_kernel(%arg0: i32, %arg1: memref<8x32xf32, #tpu.memory_space<vmem>>, %arg2: memref<32x128xf32, #tpu.memory_space<vmem>>, %arg3: memref<1x128xf32, #tpu.memory_space<vmem>>, %arg4: memref<128x128xf32, #tpu.memory_space<vmem>>, %arg5: memref<1x128xf32, #tpu.memory_space<vmem>>, %arg6: memref<1x128xf32, #tpu.memory_space<vmem>>, %arg7: memref<1x128xf32, #tpu.memory_space<vmem>>, %arg8: memref<8x128xf32, #tpu.memory_space<vmem>>) attributes {dimension_semantics = [#tpu.dimension_semantics<parallel>], iteration_bounds = array<i64: 1>, scalar_prefetch = 0 : i64, scratch_operands = 0 : i64, tpu.core_type = #tpu.core_type<tc>, window_params = [{transform_indices = @transform_0, window_bounds = array<i64: 8, 32>}, {pipeline_mode = #tpu.pipeline_mode<synchronous>, transform_indices = @transform_1, window_bounds = array<i64: 32, 128>}, {pipeline_mode = #tpu.pipeline_mode<synchronous>, transform_indices = @transform_2, window_bounds = array<i64: 1, 128>}, {pipeline_mode = #tpu.pipeline_mode<synchronous>, transform_indices = @transform_3, window_bounds = array<i64: 128, 128>}, {pipeline_mode = #tpu.pipeline_mode<synchronous>, transform_indices = @transform_4, window_bounds = array<i64: 1, 128>}, {pipeline_mode = #tpu.pipeline_mode<synchronous>, transform_indices = @transform_5, window_bounds = array<i64: 1, 128>}, {pipeline_mode = #tpu.pipeline_mode<synchronous>, transform_indices = @transform_6, window_bounds = array<i64: 1, 128>}, {transform_indices = @transform_7, window_bounds = array<i64: 8, 128>}]} {
    %c0 = arith.constant 0 : index
    %c0_0 = arith.constant 0 : index
    %0 = vector.load %arg1[%c0, %c0_0] : memref<8x32xf32, #tpu.memory_space<vmem>>, vector<8x32xf32>
    %c0_1 = arith.constant 0 : index
    %c0_2 = arith.constant 0 : index
    %1 = vector.load %arg2[%c0_1, %c0_2] : memref<32x128xf32, #tpu.memory_space<vmem>>, vector<32x128xf32>
    %cst = arith.constant dense<0.000000e+00> : vector<8x128xf32>
    %2 = tpu.matmul %0, %1, %cst {dimension_numbers = #tpu.dot_dimension_numbers<[1], [0], [0], [1], [0, 0, 1, 1], [], []>} : vector<8x32xf32>, vector<32x128xf32>, vector<8x128xf32> -> vector<8x128xf32>
    %c0_3 = arith.constant 0 : index
    %c0_4 = arith.constant 0 : index
    %3 = vector.load %arg3[%c0_3, %c0_4] : memref<1x128xf32, #tpu.memory_space<vmem>>, vector<1x128xf32>
    %4 = vector.broadcast %3 : vector<1x128xf32> to vector<8x128xf32>
    %5 = arith.addf %2, %4 : vector<8x128xf32>
    %cst_5 = arith.constant 5.000000e-01 : f32
    %6 = vector.broadcast %cst_5 : f32 to vector<8x128xf32>
    %7 = arith.mulf %6, %5 : vector<8x128xf32>
    %cst_6 = arith.constant 0.707106769 : f32
    %8 = vector.broadcast %cst_6 : f32 to vector<8x128xf32>
    %9 = arith.mulf %5, %8 : vector<8x128xf32>
    %10 = math.erf %9 : vector<8x128xf32>
    %cst_7 = arith.constant 1.000000e+00 : f32
    %11 = vector.broadcast %cst_7 : f32 to vector<8x128xf32>
    %12 = arith.addf %11, %10 : vector<8x128xf32>
    %13 = arith.mulf %7, %12 : vector<8x128xf32>
    %c0_8 = arith.constant 0 : index
    %c0_9 = arith.constant 0 : index
    %14 = vector.load %arg4[%c0_8, %c0_9] : memref<128x128xf32, #tpu.memory_space<vmem>>, vector<128x128xf32>
    %cst_10 = arith.constant dense<0.000000e+00> : vector<8x128xf32>
    %15 = tpu.matmul %13, %14, %cst_10 {dimension_numbers = #tpu.dot_dimension_numbers<[1], [0], [0], [1], [0, 0, 1, 1], [], []>} : vector<8x128xf32>, vector<128x128xf32>, vector<8x128xf32> -> vector<8x128xf32>
    %c0_11 = arith.constant 0 : index
    %c0_12 = arith.constant 0 : index
    %16 = vector.load %arg5[%c0_11, %c0_12] : memref<1x128xf32, #tpu.memory_space<vmem>>, vector<1x128xf32>
    %17 = vector.broadcast %16 : vector<1x128xf32> to vector<8x128xf32>
    %18 = arith.addf %15, %17 : vector<8x128xf32>
    %19 = arith.addf %18, %5 : vector<8x128xf32>
    %cst_13 = arith.constant dense<0.000000e+00> : vector<8xf32>
    %20 = vector.multi_reduction <add>, %19, %cst_13 [1] : vector<8x128xf32> to vector<8xf32>
    %21 = vector.shape_cast %20 : vector<8xf32> to vector<8x1xf32>
    %cst_14 = arith.constant 1.280000e+02 : f32
    %22 = vector.broadcast %cst_14 : f32 to vector<8x1xf32>
    %23 = arith.divf %21, %22 : vector<8x1xf32>
    %24 = vector.broadcast %23 : vector<8x1xf32> to vector<8x128xf32>
    %25 = arith.subf %19, %24 : vector<8x128xf32>
    %26 = arith.mulf %25, %25 : vector<8x128xf32>
    %cst_15 = arith.constant dense<0.000000e+00> : vector<8xf32>
    %27 = vector.multi_reduction <add>, %26, %cst_15 [1] : vector<8x128xf32> to vector<8xf32>
    %28 = vector.shape_cast %27 : vector<8xf32> to vector<8x1xf32>
    %cst_16 = arith.constant 1.280000e+02 : f32
    %29 = vector.broadcast %cst_16 : f32 to vector<8x1xf32>
    %30 = arith.divf %28, %29 : vector<8x1xf32>
    %cst_17 = arith.constant 9.99999974E-6 : f32
    %31 = vector.broadcast %cst_17 : f32 to vector<8x1xf32>
    %32 = arith.addf %30, %31 : vector<8x1xf32>
    %33 = math.rsqrt %32 : vector<8x1xf32>
    %34 = vector.broadcast %33 : vector<8x1xf32> to vector<8x128xf32>
    %35 = arith.mulf %25, %34 : vector<8x128xf32>
    %c0_18 = arith.constant 0 : index
    %c0_19 = arith.constant 0 : index
    %36 = vector.load %arg6[%c0_18, %c0_19] : memref<1x128xf32, #tpu.memory_space<vmem>>, vector<1x128xf32>
    %37 = vector.broadcast %36 : vector<1x128xf32> to vector<8x128xf32>
    %38 = arith.mulf %35, %37 : vector<8x128xf32>
    %c0_20 = arith.constant 0 : index
    %c0_21 = arith.constant 0 : index
    %39 = vector.load %arg7[%c0_20, %c0_21] : memref<1x128xf32, #tpu.memory_space<vmem>>, vector<1x128xf32>
    %40 = vector.broadcast %39 : vector<1x128xf32> to vector<8x128xf32>
    %41 = arith.addf %38, %40 : vector<8x128xf32>
    %c0_22 = arith.constant 0 : index
    %c0_23 = arith.constant 0 : index
    %42 = vector.load %arg8[%c0_22, %c0_23] : memref<8x128xf32, #tpu.memory_space<vmem>>, vector<8x128xf32>
    tpu.vector_store %arg8[%c0_22, %c0_23], %41 {strides = array<i32>} : memref<8x128xf32, #tpu.memory_space<vmem>>, vector<8x128xf32>,
    return
  }
  func.func @transform_0(%arg0: i32) -> (i32, i32) {
    %c0_i32 = arith.constant 0 : i32
    %c0_i32_0 = arith.constant 0 : i32
    return %arg0, %c0_i32 : i32, i32
  }
  func.func @transform_1(%arg0: i32) -> (i32, i32) {
    %c0_i32 = arith.constant 0 : i32
    %c0_i32_0 = arith.constant 0 : i32
    %c0_i32_1 = arith.constant 0 : i32
    return %c0_i32, %c0_i32_0 : i32, i32
  }
  func.func @transform_2(%arg0: i32) -> (i32, i32) {
    %c0_i32 = arith.constant 0 : i32
    %c0_i32_0 = arith.constant 0 : i32
    %c0_i32_1 = arith.constant 0 : i32
    return %c0_i32, %c0_i32_0 : i32, i32
  }
  func.func @transform_3(%arg0: i32) -> (i32, i32) {
    %c0_i32 = arith.constant 0 : i32
    %c0_i32_0 = arith.constant 0 : i32
    %c0_i32_1 = arith.constant 0 : i32
    return %c0_i32, %c0_i32_0 : i32, i32
  }
  func.func @transform_4(%arg0: i32) -> (i32, i32) {
    %c0_i32 = arith.constant 0 : i32
    %c0_i32_0 = arith.constant 0 : i32
    %c0_i32_1 = arith.constant 0 : i32
    return %c0_i32, %c0_i32_0 : i32, i32
  }
  func.func @transform_5(%arg0: i32) -> (i32, i32) {
    %c0_i32 = arith.constant 0 : i32
    %c0_i32_0 = arith.constant 0 : i32
    %c0_i32_1 = arith.constant 0 : i32
    return %c0_i32, %c0_i32_0 : i32, i32
  }
  func.func @transform_6(%arg0: i32) -> (i32, i32) {
    %c0_i32 = arith.constant 0 : i32
    %c0_i32_0 = arith.constant 0 : i32
    %c0_i32_1 = arith.constant 0 : i32
    return %c0_i32, %c0_i32_0 : i32, i32
  }
  func.func @transform_7(%arg0: i32) -> (i32, i32) {
    %c0_i32 = arith.constant 0 : i32
    %c0_i32_0 = arith.constant 0 : i32
    return %arg0, %c0_i32 : i32, i32
  }
}

</mosaic_0001>

<llo_original>
// kernel: projection_head_gelu.1
$region0: #{projection_head_gelu.1}
  #allocation0 [shape = 'u32[]', space=smem, size = 0x4, offset = 0x4, fixed_abs, tag = 'smem constant byte address 0x4 - core index']
  #allocation1 [shape = 'u32[144,128]{1,0:T(1,128)}', space=vmem, size = 0x12000, scoped, tag = 'internal scratch']
  %s0 = inlined_call_operand.vmem [shape: f32[8,32], index: 0, kind: input, shape index: {}]
  %s1 = inlined_call_operand.hbm [shape: f32[32,128], index: 1, kind: input, shape index: {}]
  %s2 = inlined_call_operand.vmem [shape: f32[1,128], index: 2, kind: input, shape index: {}]
  %s3 = inlined_call_operand.hbm [shape: f32[128,128], index: 3, kind: input, shape index: {}]
  %s4 = inlined_call_operand.vmem [shape: f32[1,128], index: 4, kind: input, shape index: {}]
  %s5 = inlined_call_operand.vmem [shape: f32[1,128], index: 5, kind: input, shape index: {}]
  %s6 = inlined_call_operand.vmem [shape: f32[1,128], index: 6, kind: input, shape index: {}]
  %s7 = inlined_call_operand.hbm [shape: f32[8,128], index: 7, kind: output, shape index: {}]
  %s8 = sld [smem:[#allocation0]]
  $region46: #{projection_head_gelu.1} parent=0
    _
  %s10 = ssub.s32 1, %s8
  %s11 = scalar_select 0, %s10, %s8
  $region1: #{projection_head_gelu.1} parent=0
    #allocation2 [shape = 'u8[16384]{0}', space=vmem, size = 0x4000, scoped, tag = 'input window, operand 1, single buffered']
    #allocation3 [shape = 's32[1]{0}', space=sflag, size = 0x4, scoped, tag = 'scoped memory for projection_head_gelu.1']
    #allocation4 [shape = 's32[1]{0}', space=sflag, size = 0x4, scoped, tag = 'scoped memory for projection_head_gelu.1']
    #allocation5 [shape = 'u8[65536]{0}', space=vmem, size = 0x10000, scoped, tag = 'input window, operand 3, single buffered']
    #allocation6 [shape = 's32[1]{0}', space=sflag, size = 0x4, scoped, tag = 'scoped memory for projection_head_gelu.1']
    #allocation7 [shape = 'u8[4096]{0}', space=vmem, size = 0x1000, scoped, tag = 'output window, operand 0, single buffered']
    %12 = vsyncpa [#allocation3], 0
    %13 = vsyncpa [#allocation6], 0
    %14 = vsyncpa [#allocation4], 0
    // Predicated region
    $region2: #{projection_head_gelu.1} parent=1 // pred_check
      _
    $region3: #{projection_head_gelu.1} parent=1 // pred_check_branch
      %16 = sbr.rel (0) target = $region5
    $region4: #{projection_head_gelu.1} parent=1 // pred_region
      _
    $region5: #{projection_head_gelu.1} parent=1 // pred_fallthru
      _
    // Predicated region
    $region6: #{projection_head_gelu.1} parent=1 // pred_check
      _
    $region7: #{projection_head_gelu.1} parent=1 // pred_check_branch
      %18 = sbr.rel (0) target = $region9
    $region8: #{projection_head_gelu.1} parent=1 // pred_region
      %s20 = ssub.s32 512, 512
      %21 = vsyncadd [#allocation3], %s20
      %s22 = sshll.u32 [#allocation2], 4
      %s23 = int_to_ptr.vmem [resolvable:$true] %s22
      %28 = dma.hbm_to_vmem [thread:$0]  %s1, 512, %s23, [#allocation3], 128, 128, 8
    $region9: #{projection_head_gelu.1} parent=1 // pred_fallthru
      _
    // Predicated region
    $region10: #{projection_head_gelu.1} parent=1 // pred_check
      _
    $region11: #{projection_head_gelu.1} parent=1 // pred_check_branch
      %30 = sbr.rel (0) target = $region13
    $region12: #{projection_head_gelu.1} parent=1 // pred_region
      _
    $region13: #{projection_head_gelu.1} parent=1 // pred_fallthru
      _
    // Predicated region
    $region14: #{projection_head_gelu.1} parent=1 // pred_check
      _
    $region15: #{projection_head_gelu.1} parent=1 // pred_check_branch
      %32 = sbr.rel (0) target = $region17
    $region16: #{projection_head_gelu.1} parent=1 // pred_region
      %s34 = ssub.s32 2048, 2048
      %35 = vsyncadd [#allocation6], %s34
      %s36 = sshll.u32 [#allocation5], 4
      %s37 = int_to_ptr.vmem [resolvable:$true] %s36
      %42 = dma.hbm_to_vmem [thread:$0]  %s3, 2048, %s37, [#allocation6], 128, 128, 8
    $region17: #{projection_head_gelu.1} parent=1 // pred_fallthru
      _
    // Predicated region
    $region18: #{projection_head_gelu.1} parent=1 // pred_check
      _
    $region19: #{projection_head_gelu.1} parent=1 // pred_check_branch
      %44 = sbr.rel (0) target = $region21
    $region20: #{projection_head_gelu.1} parent=1 // pred_region
      _
    $region21: #{projection_head_gelu.1} parent=1 // pred_fallthru
      _
    // Predicated region
    $region22: #{projection_head_gelu.1} parent=1 // pred_check
      _
    $region23: #{projection_head_gelu.1} parent=1 // pred_check_branch
      %46 = sbr.rel (0) target = $region25
    $region24: #{projection_head_gelu.1} parent=1 // pred_region
      _
    $region25: #{projection_head_gelu.1} parent=1 // pred_fallthru
      _
    // Predicated region
    $region26: #{projection_head_gelu.1} parent=1 // pred_check
      _
    $region27: #{projection_head_gelu.1} parent=1 // pred_check_branch
      %48 = sbr.rel (0) target = $region29
    $region28: #{projection_head_gelu.1} parent=1 // pred_region
      _
    $region29: #{projection_head_gelu.1} parent=1 // pred_fallthru
      _
    // Predicated region
    $region30: #{projection_head_gelu.1} parent=1 // pred_check
      _
    $region31: #{projection_head_gelu.1} parent=1 // pred_check_branch
      %50 = sbr.rel (0) target = $region33
    $region32: #{projection_head_gelu.1} parent=1 // pred_region
      %51 = dma.done [#allocation3], 512
    $region33: #{projection_head_gelu.1} parent=1 // pred_fallthru
      _
    // Predicated region
    $region34: #{projection_head_gelu.1} parent=1 // pred_check
      _
    $region35: #{projection_head_gelu.1} parent=1 // pred_check_branch
      %53 = sbr.rel (0) target = $region37
    $region36: #{projection_head_gelu.1} parent=1 // pred_region
      %54 = dma.done [#allocation6], 2048
    $region37: #{projection_head_gelu.1} parent=1 // pred_fallthru
      _
    %v55 = vld [vmem:[%s0] sm:$0xff]
    %v56 = vld [vmem:[#allocation2] sm:$0xff]
    %v57 = vld [vmem:[#allocation2 + $0x8] sm:$0xff]
    %v58 = vld [vmem:[#allocation2 + $0x10] sm:$0xff]
    %v59 = vld [vmem:[#allocation2 + $0x18] sm:$0xff]
    %v60 = vld [vmem:[%s2] sm:$0x1]
    %v62 = vlaneseq
    %v63 = vshrl.u32 %v62, 7
    %v64 = vsub.s32 0, %v63
    %v65 = vrot.slane %v60, %v64
    %vm67 = vcmask 261120
    %v69 = vsel %vm67, %v55, 0
    %71 = vmatprep.subr.mxu0 0.0
    %72 = vmatpush1.msra.mxu0 %v56
    %73 = vmatprep.subr.mxu0 0.0
    %74 = vmatpush1.msra.mxu0 %v57
    %75 = vmatprep.subr.mxu0 0.0
    %76 = vmatpush1.msra.mxu0 %v58
    %77 = vmatprep.subr.mxu0 0.0
    %78 = vmatpush1.msra.mxu0 %v59
    %79 = vmatprep.subr.mxu0 0.0
    %80 = vmatpush1.msra.mxu0 0.0
    %81 = vmatprep.subr.mxu0 0.0
    %82 = vmatpush1.msra.mxu0 0.0
    %83 = vmatprep.subr.mxu0 0.0
    %84 = vmatpush1.msra.mxu0 0.0
    %85 = vmatprep.subr.mxu0 0.0
    %86 = vmatpush1.msra.mxu0 0.0
    %87 = vmatprep.subr.mxu0 0.0
    %88 = vmatpush1.msra.mxu0 0.0
    %89 = vmatprep.subr.mxu0 0.0
    %90 = vmatpush1.msra.mxu0 0.0
    %91 = vmatprep.subr.mxu0 0.0
    %92 = vmatpush1.msra.mxu0 0.0
    %93 = vmatprep.subr.mxu0 0.0
    %94 = vmatpush1.msra.mxu0 0.0
    %95 = vmatprep.subr.mxu0 0.0
    %96 = vmatpush1.msra.mxu0 0.0
    %97 = vmatprep.subr.mxu0 0.0
    %98 = vmatpush1.msra.mxu0 0.0
    %99 = vmatprep.subr.mxu0 0.0
    %100 = vmatpush1.msra.mxu0 0.0
    %101 = vmatprep.subr.mxu0 0.0
    %102 = vmatpush1.msra.mxu0 0.0
    %103 = vmatprep.subr.mxu0 0.0
    %104 = vmatpush1.msra.mxu0 0.0
    %105 = vmatprep.subr.mxu0 0.0
    %106 = vmatpush1.msra.mxu0 0.0
    %107 = vmatprep.subr.mxu0 0.0
    %108 = vmatpush1.msra.mxu0 0.0
    %109 = vmatprep.subr.mxu0 0.0
    %110 = vmatpush1.msra.mxu0 0.0
    %111 = vmatprep.subr.mxu0 0.0
    %112 = vmatpush1.msra.mxu0 0.0
    %113 = vmatprep.subr.mxu0 0.0
    %114 = vmatpush1.msra.mxu0 0.0
    %115 = vmatprep.subr.mxu0 0.0
    %116 = vmatpush1.msra.mxu0 0.0
    %117 = vmatprep.subr.mxu0 0.0
    %118 = vmatpush1.msra.mxu0 0.0
    %119 = vmatprep.subr.mxu0 0.0
    %120 = vmatpush1.msra.mxu0 0.0
    %121 = vmatprep.subr.mxu0 0.0
    %122 = vmatpush1.msra.mxu0 0.0
    %123 = vmatprep.subr.mxu0 0.0
    %124 = vmatpush1.msra.mxu0 0.0
    %125 = vmatprep.subr.mxu0 0.0
    %126 = vmatpush1.msra.mxu0 0.0
    %127 = vmatprep.subr.mxu0 0.0
    %128 = vmatpush1.msra.mxu0 0.0
    %129 = vmatprep.subr.mxu0 0.0
    %130 = vmatpush1.msra.mxu0 0.0
    %131 = vmatprep.subr.mxu0 0.0
    %132 = vmatpush1.msra.mxu0 0.0
    %133 = vmatprep.subr.mxu0 0.0
    %134 = vmatpush1.msra.mxu0 0.0
    %135 = vmatprep.mubr.f32.mxu0 0.0
    %136 = vmatmul.mubr.f32.gmra.mrb[0].mxu0 %v69
    %v137 = vpop.f32.mrb[0].mxu0
    %v138 = vadd.f32 %v65, %v137
    %v139 = vpop.f32.mrb[0].mxu0
    %140 = vdwg.mxu0
    %v141 = vmul.f32 %v138, 0.5
    %v142 = vmul.f32 %v138, 0.70710677
    %v143 = verf.f32.pop %v142
    %v144 = vadd.f32 %v143, 1.0
    %v145 = vmul.f32 %v141, %v144
    %v146 = vld [vmem:[#allocation5] sm:$0xff]
    %v147 = vld [vmem:[#allocation5 + $0x8] sm:$0xff]
    %v148 = vld [vmem:[#allocation5 + $0x10] sm:$0xff]
    %v149 = vld [vmem:[#allocation5 + $0x18] sm:$0xff]
    %v150 = vld [vmem:[#allocation5 + $0x20] sm:$0xff]
    %v151 = vld [vmem:[#allocation5 + $0x28] sm:$0xff]
    %v152 = vld [vmem:[#allocation5 + $0x30] sm:$0xff]
    %v153 = vld [vmem:[#allocation5 + $0x38] sm:$0xff]
    %v154 = vld [vmem:[#allocation5 + $0x40] sm:$0xff]
    %v155 = vld [vmem:[#allocation5 + $0x48] sm:$0xff]
    %v156 = vld [vmem:[#allocation5 + $0x50] sm:$0xff]
    %v157 = vld [vmem:[#allocation5 + $0x58] sm:$0xff]
    %v158 = vld [vmem:[#allocation5 + $0x60] sm:$0xff]
    %v159 = vld [vmem:[#allocation5 + $0x68] sm:$0xff]
    %v160 = vld [vmem:[#allocation5 + $0x70] sm:$0xff]
    %v161 = vld [vmem:[#allocation5 + $0x78] sm:$0xff]
    %v162 = vld [vmem:[%s4] sm:$0x1]
    %v164 = vlaneseq
    %v165 = vshrl.u32 %v164, 7
    %v166 = vsub.s32 0, %v165
    %v167 = vrot.slane %v162, %v166
    %169 = vmatprep.subr.mxu0 0.0
    %170 = vmatpush1.msra.mxu0 %v146
    %171 = vmatprep.subr.mxu0 0.0
    %172 = vmatpush1.msra.mxu0 %v147
    %173 = vmatprep.subr.mxu0 0.0
    %174 = vmatpush1.msra.mxu0 %v148
    %175 = vmatprep.subr.mxu0 0.0
    %176 = vmatpush1.msra.mxu0 %v149
    %177 = vmatprep.subr.mxu0 0.0
    %178 = vmatpush1.msra.mxu0 %v150
    %179 = vmatprep.subr.mxu0 0.0
    %180 = vmatpush1.msra.mxu0 %v151
    %181 = vmatprep.subr.mxu0 0.0
    %182 = vmatpush1.msra.mxu0 %v152
    %183 = vmatprep.subr.mxu0 0.0
    %184 = vmatpush1.msra.mxu0 %v153
    %185 = vmatprep.subr.mxu0 0.0
    %186 = vmatpush1.msra.mxu0 %v154
    %187 = vmatprep.subr.mxu0 0.0
    %188 = vmatpush1.msra.mxu0 %v155
    %189 = vmatprep.subr.mxu0 0.0
    %190 = vmatpush1.msra.mxu0 %v156
    %191 = vmatprep.subr.mxu0 0.0
    %192 = vmatpush1.msra.mxu0 %v157
    %193 = vmatprep.subr.mxu0 0.0
    %194 = vmatpush1.msra.mxu0 %v158
    %195 = vmatprep.subr.mxu0 0.0
    %196 = vmatpush1.msra.mxu0 %v159
    %197 = vmatprep.subr.mxu0 0.0
    %198 = vmatpush1.msra.mxu0 %v160
    %199 = vmatprep.subr.mxu0 0.0
    %200 = vmatpush1.msra.mxu0 %v161
    %201 = vmatprep.subr.mxu0 0.0
    %202 = vmatpush1.msra.mxu0 0.0
    %203 = vmatprep.subr.mxu0 0.0
    %204 = vmatpush1.msra.mxu0 0.0
    %205 = vmatprep.subr.mxu0 0.0
    %206 = vmatpush1.msra.mxu0 0.0
    %207 = vmatprep.subr.mxu0 0.0
    %208 = vmatpush1.msra.mxu0 0.0
    %209 = vmatprep.subr.mxu0 0.0
    %210 = vmatpush1.msra.mxu0 0.0
    %211 = vmatprep.subr.mxu0 0.0
    %212 = vmatpush1.msra.mxu0 0.0
    %213 = vmatprep.subr.mxu0 0.0
    %214 = vmatpush1.msra.mxu0 0.0
    %215 = vmatprep.subr.mxu0 0.0
    %216 = vmatpush1.msra.mxu0 0.0
    %217 = vmatprep.subr.mxu0 0.0
    %218 = vmatpush1.msra.mxu0 0.0
    %219 = vmatprep.subr.mxu0 0.0
    %220 = vmatpush1.msra.mxu0 0.0
    %221 = vmatprep.subr.mxu0 0.0
    %222 = vmatpush1.msra.mxu0 0.0
    %223 = vmatprep.subr.mxu0 0.0
    %224 = vmatpush1.msra.mxu0 0.0
    %225 = vmatprep.subr.mxu0 0.0
    %226 = vmatpush1.msra.mxu0 0.0
    %227 = vmatprep.subr.mxu0 0.0
    %228 = vmatpush1.msra.mxu0 0.0
    %229 = vmatprep.subr.mxu0 0.0
    %230 = vmatpush1.msra.mxu0 0.0
    %231 = vmatprep.subr.mxu0 0.0
    %232 = vmatpush1.msra.mxu0 0.0
    %233 = vmatprep.mubr.f32.mxu0 0.0
    %234 = vmatmul.mubr.f32.gmra.mrb[0].mxu0 %v145
    %v235 = vpop.f32.mrb[0].mxu0
    %v236 = vadd.f32 %v167, %v235
    %v237 = vpop.f32.mrb[0].mxu0
    %238 = vdwg.mxu0
    %v239 = vadd.f32 %v236, %v138
    %240 = vadd.xlane.f32.xlu0 %v239
    %v241 = vpop.xlane.xlu0 %240
    %v242 = vrcp.pop 128.0
    %v243 = vmul.f32 %v241, %v242
    %v244 = vsub.f32 %v239, %v243
    %v245 = vmul.f32 %v244, %v244
    %246 = vadd.xlane.f32.xlu0 %v245
    %v247 = vpop.xlane.xlu0 %246
    %v248 = vmul.f32 %v247, %v242
    %v249 = vadd.f32 %v248, 1e-05
    %v250 = vrsqrt.pop %v249
    %v251 = vmul.f32 %v244, %v250
    %v252 = vld [vmem:[%s5] sm:$0x1]
    %v254 = vlaneseq
    %v255 = vshrl.u32 %v254, 7
    %v256 = vsub.s32 0, %v255
    %v257 = vrot.slane %v252, %v256
    %v259 = vmul.f32 %v251, %v257
    %v260 = vld [vmem:[%s6] sm:$0x1]
    %v262 = vlaneseq
    %v263 = vshrl.u32 %v262, 7
    %v264 = vsub.s32 0, %v263
    %v265 = vrot.slane %v260, %v264
    %v267 = vadd.f32 %v259, %v265
    %268 = vst [vmem:[#allocation7] sm:$0xff] %v267
    // Predicated region
    $region38: #{projection_head_gelu.1} parent=1 // pred_check
      _
    $region39: #{projection_head_gelu.1} parent=1 // pred_check_branch
      %270 = sbr.rel (0) target = $region41
    $region40: #{projection_head_gelu.1} parent=1 // pred_region
      %s272 = ssub.s32 128, 128
      %273 = vsyncadd [#allocation4], %s272
      %s275 = sshll.u32 [#allocation7], 4
      %s276 = int_to_ptr.vmem [resolvable:$true] %s275
      %278 = dma.vmem_to_hbm [thread:$0]  %s276, 128, %s7, [#allocation4]
    $region41: #{projection_head_gelu.1} parent=1 // pred_fallthru
      _
    // Predicated region
    $region42: #{projection_head_gelu.1} parent=1 // pred_check
      _
    $region43: #{projection_head_gelu.1} parent=1 // pred_check_branch
      %280 = sbr.rel (0) target = $region45
    $region44: #{projection_head_gelu.1} parent=1 // pred_region
      %281 = dma.done [#allocation4], 128
    $region45: #{projection_head_gelu.1} parent=1 // pred_fallthru
      _
    %282 = vsyncpa [#allocation3], 1
    %283 = vsyncpa [#allocation6], 1
    %284 = vsyncpa [#allocation4], 1

</llo_original>
